<compile_context>
chip_gen: v7x
topology: tpu7x:2x2x1
jax: 0.10.0
libtpu: 0.0.40
codegen_flags: <defaults>
</compile_context>

<pallas_src>
import jax
import jax.numpy as jnp
from jax.experimental import pallas as pl
from jax.experimental.pallas import tpu as pltpu

EPS = 1e-5          # nn.BatchNorm1d default eps
N_DROPOUTS = 5      # len(self.dropouts)  (identity in eval mode)


def _round_up(n, m):
    return ((n + m - 1) // m) * m


def _vmem_budgets():
    """(x double-buffer budget, vmem_limit cap) in bytes, per TPU generation."""
    vmem_cap = 0
    try:
        info = pltpu.get_tpu_info()
        vmem_cap = int(getattr(info, "vmem_capacity_bytes", 0) or 0)
    except Exception:
        vmem_cap = 0
    if vmem_cap >= 100 * 1024 * 1024:                # v5e / v6e: 128 MiB VMEM
        return 48 * 1024 * 1024, 96 * 1024 * 1024
    if vmem_cap > 0:                                 # v7x: 64 MiB per TensorCore
        return 26 * 1024 * 1024, 48 * 1024 * 1024
    return 24 * 1024 * 1024, 48 * 1024 * 1024        # unknown: conservative


def _choose_tiles(B, C, HW, itemsize, x_budget):
    """Pick (batch_tile, hw_tile): widest lane tile whose double-buffered x
    block fits the generation-specific budget.  No artificial 2048 cap."""
    b_tile = B if B <= 8 else 8                      # full batch block when small
    hw_tile = _round_up(max(HW, 1), 128)             # lane dim: multiple of 128
    while hw_tile > 128 and 2 * b_tile * C * hw_tile * itemsize > x_budget:
        hw_tile = max(128, ((hw_tile // 2) // 128) * 128)
    return b_tile, hw_tile


def _make_kernel(inv_hw, hw, hw_tile, n_lane_chunks, mask_needed):
    def kernel(x_ref, xm_ref, w1_ref, b1_ref, w2_ref, b2_ref,
               wfcf_ref, wfcm_ref, bfc_ref, out_ref, acc_ref):
        k = pl.program_id(1)
        nk = pl.num_programs(1)

        # ---- init pooling accumulator on first HW step ----------------------
        @pl.when(k == 0)
        def _init():
            acc_ref[...] = jnp.zeros_like(acc_ref)

        # ---- backbone stand-in: global average pool (partial sums) ----------
        xb = x_ref[...].astype(jnp.float32)           # [b_tile, C, hw_tile]
        if mask_needed:
            lane = jax.lax.broadcasted_iota(jnp.int32, (1, 1, hw_tile), 2)
            valid = (k * hw_tile + lane) < hw          # zero OOB lanes of the last tile
            xb = jnp.where(valid, xb, 0.0)

        # Fold the hw_tile lanes into a (b_tile, C, 128) partial with pure
        # vreg adds (lane-aligned static slices); no per-step XLU reduction.
        if n_lane_chunks <= 16:
            partial = xb[:, :, 0:128]
            for c in range(1, n_lane_chunks):
                partial = partial + xb[:, :, c * 128:(c + 1) * 128]
        else:
            partial = xb.reshape(xb.shape[0], xb.shape[1], n_lane_chunks, 128).sum(axis=2)
        acc_ref[...] += partial

        # ---- head work only on the last HW step -----------------------------
        @pl.when(k == nk - 1)
        def _finalize():
            # single lane reduce per batch tile == enet(x).squeeze()
            feat = jnp.sum(acc_ref[...], axis=-1) * inv_hw      # [b_tile, C]

            # meta branch: (Linear+BN fused) -> Swish -> Dropout(eval) ->
            #              (Linear+BN fused) -> Swish
            xm = xm_ref[...].astype(jnp.float32)
            h = jnp.dot(xm, w1_ref[...], preferred_element_type=jnp.float32) + b1_ref[...]
            h = h * jax.nn.sigmoid(h)                 # Swish (exp goes to EUP)
            h = jnp.dot(h, w2_ref[...], preferred_element_type=jnp.float32) + b2_ref[...]
            h = h * jax.nn.sigmoid(h)

            # cat((feat, meta), 1) @ Wfc == feat @ Wf + meta @ Wm.
            # The 5 eval-mode dropout branches are identical, so the
            # accumulate-then-divide equals one evaluation.
            out_ref[...] = (
                jnp.dot(feat, wfcf_ref[...], preferred_element_type=jnp.float32)
                + jnp.dot(h, wfcm_ref[...], preferred_element_type=jnp.float32)
                + bfc_ref[...])
    return kernel


def seresnext_forward(x, x_meta, params):
    """x: [B, C, H, W] (NCHW, any float dtype), x_meta: [B, n_meta]. Returns [B, out_dim]."""
    B, C, H, W = x.shape
    HW = H * W
    M = x_meta.shape[1]

    # ---- fold BatchNorm1d (eval) into the preceding Linear at trace time ----
    def fuse(w, b, bn):
        g, beta, mean, var = bn[0:1], bn[1:2], bn[2:3], bn[3:4]
        scale = g * jax.lax.rsqrt(var + EPS)
        return ((w * scale).astype(jnp.float32),
                ((b - mean) * scale + beta).astype(jnp.float32))

    w1f, b1f = fuse(params["w1"], params["b1"], params["bn1"])
    w2f, b2f = fuse(params["w2"], params["b2"], params["bn2"])

    # ---- pad myfc output to a lane-dense 128-wide slab (tiny) ----------------
    out_dim = params["bfc"].shape[-1]
    outp = _round_up(out_dim, 128)
    pad_o = outp - out_dim
    # Weights kept in f32 to match the f32 reference; bf16 storage would halve
    # weight DMA but the head is tiny so the win is negligible here.
    wfc_f = jnp.pad(params["wfc_f"].astype(jnp.float32), ((0, 0), (0, pad_o)))
    wfc_m = jnp.pad(params["wfc_m"].astype(jnp.float32), ((0, 0), (0, pad_o)))
    bfc = jnp.pad(params["bfc"].astype(jnp.float32), ((0, 0), (0, pad_o)))
    D1, D2 = w1f.shape[1], w2f.shape[1]

    # ---- image as [B, C, HW] in its NATIVE dtype, NO HBM padding copy --------
    x3 = x.reshape(B, C, HW)
    xm = x_meta

    x_budget, vmem_cap = _vmem_budgets()
    b_tile, hw_tile = _choose_tiles(B, C, HW, x3.dtype.itemsize, x_budget)
    n_lane_chunks = hw_tile // 128
    mask_needed = (HW % hw_tile) != 0      # ragged last HW tile masked in-kernel

    grid = (pl.cdiv(B, b_tile), pl.cdiv(HW, hw_tile))

    # ---- cost estimate + VMEM sizing ------------------------------------------
    x_itemsize = x3.dtype.itemsize
    w_bytes = 4 * int(w1f.size + b1f.size + w2f.size + b2f.size
                      + wfc_f.size + wfc_m.size + bfc.size)
    bytes_accessed = int(grid[0] * b_tile * C * grid[1] * hw_tile * x_itemsize
                         + B * M * xm.dtype.itemsize
                         + w_bytes + B * outp * 4)
    flops = int(B * C * HW
                + 2 * B * (M * D1 + D1 * D2 + (C + D2) * outp)
                + 6 * B * (D1 + D2))
    transcendentals = int(B * (D1 + D2))

    x_blk_bytes = b_tile * C * hw_tile * x_itemsize
    est_vmem = (2 * x_blk_bytes                       # double-buffered x block
                + 2 * b_tile * M * xm.dtype.itemsize
                + 2 * w_bytes                          # weights (double-buffered)
                + 2 * b_tile * outp * 4
                + b_tile * C * 128 * 4)                # pooling accumulator scratch
    vmem_limit = int(min(vmem_cap, max(32 * 1024 * 1024, est_vmem + (8 << 20))))

    kernel = _make_kernel(1.0 / float(HW), HW, hw_tile, n_lane_chunks, mask_needed)

    out_padded = pl.pallas_call(
        kernel,
        out_shape=jax.ShapeDtypeStruct((B, outp), jnp.float32),
        grid_spec=pltpu.PrefetchScalarGridSpec(
            num_scalar_prefetch=0,
            grid=grid,
            in_specs=[
                pl.BlockSpec((b_tile, C, hw_tile), lambda b, k: (b, 0, k)),
                pl.BlockSpec((b_tile, M), lambda b, k: (b, 0)),
                pl.BlockSpec(w1f.shape, lambda b, k: (0, 0)),
                pl.BlockSpec(b1f.shape, lambda b, k: (0, 0)),
                pl.BlockSpec(w2f.shape, lambda b, k: (0, 0)),
                pl.BlockSpec(b2f.shape, lambda b, k: (0, 0)),
                pl.BlockSpec(wfc_f.shape, lambda b, k: (0, 0)),
                pl.BlockSpec(wfc_m.shape, lambda b, k: (0, 0)),
                pl.BlockSpec(bfc.shape, lambda b, k: (0, 0)),
            ],
            out_specs=pl.BlockSpec((b_tile, outp), lambda b, k: (b, 0)),
            scratch_shapes=[pltpu.VMEM((b_tile, C, 128), jnp.float32)],
        ),
        compiler_params=pltpu.CompilerParams(
            dimension_semantics=("parallel", "arbitrary"),
            vmem_limit_bytes=vmem_limit),
        cost_estimate=pl.CostEstimate(
            flops=flops, transcendentals=transcendentals,
            bytes_accessed=bytes_accessed),
    )(x3, xm, w1f, b1f, w2f, b2f, wfc_f, wfc_m, bfc)

    return out_padded[:B, :out_dim]


def _reference_forward(x, x_meta, params):
    """Pure-JAX reference mirroring the PyTorch eval-mode forward (unfused BN)."""
    B, C, H, W = x.shape
    feat = jnp.mean(x.astype(jnp.float32).reshape(B, C, H * W), axis=-1)
    h = x_meta.astype(jnp.float32) @ params["w1"] + params["b1"]
    g, b, m, v = params["bn1"][0:1], params["bn1"][1:2], params["bn1"][2:3], params["bn1"][3:4]
    h = (h - m) / jnp.sqrt(v + EPS) * g + b
    h = h * jax.nn.sigmoid(h)
    h = h @ params["w2"] + params["b2"]
    g, b, m, v = params["bn2"][0:1], params["bn2"][1:2], params["bn2"][2:3], params["bn2"][3:4]
    h = (h - m) / jnp.sqrt(v + EPS) * g + b
    h = h * jax.nn.sigmoid(h)
    cat = jnp.concatenate([feat, h], axis=1)
    wfc = jnp.concatenate([params["wfc_f"], params["wfc_m"]], axis=0)
    logits = cat @ wfc + params["bfc"]
    out = sum(logits for _ in range(N_DROPOUTS)) / N_DROPOUTS
    return out


if __name__ == "__main__":
    # small synthetic shapes consistent with the module's forward
    B, C, H, W = 2, 4, 16, 16          # C plays the role of enet.last_linear.in_features
    n_meta = 8
    n_meta_dim = [32, 16]              # scaled-down [512, 128]
    out_dim = 5

    key = jax.random.PRNGKey(0)
    ks = jax.random.split(key, 12)

    x = jax.random.normal(ks[0], (B, C, H, W), jnp.float32)
    x_meta = jax.random.normal(ks[1], (B, n_meta), jnp.float32)

    def bn_params(k, d):
        kg, kb, km, kv = jax.random.split(k, 4)
        gamma = 1.0 + 0.1 * jax.random.normal(kg, (1, d), jnp.float32)
        beta = 0.1 * jax.random.normal(kb, (1, d), jnp.float32)
        mean = 0.1 * jax.random.normal(km, (1, d), jnp.float32)
        var = 0.5 + jnp.abs(jax.random.normal(kv, (1, d), jnp.float32))
        return jnp.concatenate([gamma, beta, mean, var], axis=0)   # [4, d]

    params = {
        # meta Linear(n_meta -> n_meta_dim[0])  (weights stored as [in, out])
        "w1": 0.1 * jax.random.normal(ks[2], (n_meta, n_meta_dim[0]), jnp.float32),
        "b1": 0.1 * jax.random.normal(ks[3], (1, n_meta_dim[0]), jnp.float32),
        "bn1": bn_params(ks[4], n_meta_dim[0]),
        # meta Linear(n_meta_dim[0] -> n_meta_dim[1])
        "w2": 0.1 * jax.random.normal(ks[5], (n_meta_dim[0], n_meta_dim[1]), jnp.float32),
        "b2": 0.1 * jax.random.normal(ks[6], (1, n_meta_dim[1]), jnp.float32),
        "bn2": bn_params(ks[7], n_meta_dim[1]),
        # myfc Linear(C + n_meta_dim[1] -> out_dim), split into feat / meta parts
        "wfc_f": 0.1 * jax.random.normal(ks[8], (C, out_dim), jnp.float32),
        "wfc_m": 0.1 * jax.random.normal(ks[9], (n_meta_dim[1], out_dim), jnp.float32),
        "bfc": 0.1 * jax.random.normal(ks[10], (1, out_dim), jnp.float32),
    }

    out = seresnext_forward(x, x_meta, params)
    out = jax.block_until_ready(out)

    ref = _reference_forward(x, x_meta, params)
    assert out.shape == (B, out_dim)
    assert jnp.allclose(out, ref, atol=1e-4, rtol=1e-4), "mismatch vs reference"

    print("KERNEL_OK")
</pallas_src>

<mosaic_0001>
module attributes {stable_mosaic.version = 11 : i64} {
  func.func @kernel(%arg0: i32, %arg1: i32, %arg2: memref<2x4x256xf32, #tpu.memory_space<vmem>>, %arg3: memref<2x8xf32, #tpu.memory_space<vmem>>, %arg4: memref<8x32xf32, #tpu.memory_space<vmem>>, %arg5: memref<1x32xf32, #tpu.memory_space<vmem>>, %arg6: memref<32x16xf32, #tpu.memory_space<vmem>>, %arg7: memref<1x16xf32, #tpu.memory_space<vmem>>, %arg8: memref<4x128xf32, #tpu.memory_space<vmem>>, %arg9: memref<16x128xf32, #tpu.memory_space<vmem>>, %arg10: memref<1x128xf32, #tpu.memory_space<vmem>>, %arg11: memref<2x128xf32, #tpu.memory_space<vmem>>, %arg12: memref<2x4x128xf32, #tpu.memory_space<vmem>>) attributes {dimension_semantics = [#tpu.dimension_semantics<parallel>, #tpu.dimension_semantics<arbitrary>], iteration_bounds = array<i64: 1, 1>, scalar_prefetch = 0 : i64, scratch_operands = 1 : i64, tpu.core_type = #tpu.core_type<tc>, window_params = [{transform_indices = @transform_0, window_bounds = array<i64: 2, 4, 256>}, {transform_indices = @transform_1, window_bounds = array<i64: 2, 8>}, {pipeline_mode = #tpu.pipeline_mode<synchronous>, transform_indices = @transform_2, window_bounds = array<i64: 8, 32>}, {pipeline_mode = #tpu.pipeline_mode<synchronous>, transform_indices = @transform_3, window_bounds = array<i64: 1, 32>}, {pipeline_mode = #tpu.pipeline_mode<synchronous>, transform_indices = @transform_4, window_bounds = array<i64: 32, 16>}, {pipeline_mode = #tpu.pipeline_mode<synchronous>, transform_indices = @transform_5, window_bounds = array<i64: 1, 16>}, {pipeline_mode = #tpu.pipeline_mode<synchronous>, transform_indices = @transform_6, window_bounds = array<i64: 4, 128>}, {pipeline_mode = #tpu.pipeline_mode<synchronous>, transform_indices = @transform_7, window_bounds = array<i64: 16, 128>}, {pipeline_mode = #tpu.pipeline_mode<synchronous>, transform_indices = @transform_8, window_bounds = array<i64: 1, 128>}, {transform_indices = @transform_9, window_bounds = array<i64: 2, 128>}]} {
    %c0_i32 = arith.constant 0 : i32
    %0 = arith.cmpi eq, %arg1, %c0_i32 : i32
    %1 = arith.extui %0 : i1 to i32
    %c0_i32_0 = arith.constant 0 : i32
    %2 = arith.cmpi ne, %1, %c0_i32_0 : i32
    scf.if %2 {
      %cst = arith.constant 0.000000e+00 : f32
      %13 = vector.broadcast %cst : f32 to vector<2x4x128xf32>
      %c0_11 = arith.constant 0 : index
      %c0_12 = arith.constant 0 : index
      %c0_13 = arith.constant 0 : index
      %14 = vector.load %arg12[%c0_11, %c0_12, %c0_13] : memref<2x4x128xf32, #tpu.memory_space<vmem>>, vector<2x4x128xf32>
      tpu.vector_store %arg12[%c0_11, %c0_12, %c0_13], %13 {strides = array<i32>} : memref<2x4x128xf32, #tpu.memory_space<vmem>>, vector<2x4x128xf32>,
    } else {
    }
    %c0 = arith.constant 0 : index
    %c0_1 = arith.constant 0 : index
    %c0_2 = arith.constant 0 : index
    %3 = vector.load %arg2[%c0, %c0_1, %c0_2] : memref<2x4x256xf32, #tpu.memory_space<vmem>>, vector<2x4x256xf32>
    %4 = vector.extract_strided_slice %3 {offsets = [0, 0, 0], sizes = [2, 4, 128], strides = [1, 1, 1]} : vector<2x4x256xf32> to vector<2x4x128xf32>
    %5 = vector.extract_strided_slice %3 {offsets = [0, 0, 128], sizes = [2, 4, 128], strides = [1, 1, 1]} : vector<2x4x256xf32> to vector<2x4x128xf32>
    %6 = arith.addf %4, %5 : vector<2x4x128xf32>
    %c0_3 = arith.constant 0 : index
    %c0_4 = arith.constant 0 : index
    %c0_5 = arith.constant 0 : index
    %7 = vector.load %arg12[%c0_3, %c0_4, %c0_5] : memref<2x4x128xf32, #tpu.memory_space<vmem>>, vector<2x4x128xf32>
    %8 = arith.addf %7, %6 : vector<2x4x128xf32>
    %c0_6 = arith.constant 0 : index
    %c0_7 = arith.constant 0 : index
    %c0_8 = arith.constant 0 : index
    %9 = vector.load %arg12[%c0_6, %c0_7, %c0_8] : memref<2x4x128xf32, #tpu.memory_space<vmem>>, vector<2x4x128xf32>
    tpu.vector_store %arg12[%c0_6, %c0_7, %c0_8], %8 {strides = array<i32>} : memref<2x4x128xf32, #tpu.memory_space<vmem>>, vector<2x4x128xf32>,
    %c0_i32_9 = arith.constant 0 : i32
    %10 = arith.cmpi eq, %arg1, %c0_i32_9 : i32
    %11 = arith.extui %10 : i1 to i32
    %c0_i32_10 = arith.constant 0 : i32
    %12 = arith.cmpi ne, %11, %c0_i32_10 : i32
    scf.if %12 {
      %c0_11 = arith.constant 0 : index
      %c0_12 = arith.constant 0 : index
      %c0_13 = arith.constant 0 : index
      %13 = vector.load %arg12[%c0_11, %c0_12, %c0_13] : memref<2x4x128xf32, #tpu.memory_space<vmem>>, vector<2x4x128xf32>
      %cst = arith.constant dense<0.000000e+00> : vector<2x4xf32>
      %14 = vector.multi_reduction <add>, %13, %cst [2] : vector<2x4x128xf32> to vector<2x4xf32>
      %cst_14 = arith.constant 3.906250e-03 : f32
      %15 = vector.broadcast %cst_14 : f32 to vector<2x4xf32>
      %16 = arith.mulf %14, %15 : vector<2x4xf32>
      %c0_15 = arith.constant 0 : index
      %c0_16 = arith.constant 0 : index
      %17 = vector.load %arg3[%c0_15, %c0_16] : memref<2x8xf32, #tpu.memory_space<vmem>>, vector<2x8xf32>
      %c0_17 = arith.constant 0 : index
      %c0_18 = arith.constant 0 : index
      %18 = vector.load %arg4[%c0_17, %c0_18] : memref<8x32xf32, #tpu.memory_space<vmem>>, vector<8x32xf32>
      %cst_19 = arith.constant dense<0.000000e+00> : vector<2x32xf32>
      %19 = tpu.matmul %17, %18, %cst_19 {dimension_numbers = #tpu.dot_dimension_numbers<[1], [0], [0], [1], [0, 0, 1, 1], [], []>} : vector<2x8xf32>, vector<8x32xf32>, vector<2x32xf32> -> vector<2x32xf32>
      %c0_20 = arith.constant 0 : index
      %c0_21 = arith.constant 0 : index
      %20 = vector.load %arg5[%c0_20, %c0_21] : memref<1x32xf32, #tpu.memory_space<vmem>>, vector<1x32xf32>
      %21 = vector.broadcast %20 : vector<1x32xf32> to vector<2x32xf32>
      %22 = arith.addf %19, %21 : vector<2x32xf32>
      %23 = arith.negf %22 : vector<2x32xf32>
      %24 = math.exp %23 : vector<2x32xf32>
      %cst_22 = arith.constant 1.000000e+00 : f32
      %25 = vector.broadcast %cst_22 : f32 to vector<2x32xf32>
      %26 = arith.addf %25, %24 : vector<2x32xf32>
      %27 = arith.divf %25, %26 : vector<2x32xf32>
      %28 = arith.mulf %22, %27 : vector<2x32xf32>
      %c0_23 = arith.constant 0 : index
      %c0_24 = arith.constant 0 : index
      %29 = vector.load %arg6[%c0_23, %c0_24] : memref<32x16xf32, #tpu.memory_space<vmem>>, vector<32x16xf32>
      %cst_25 = arith.constant dense<0.000000e+00> : vector<2x16xf32>
      %30 = tpu.matmul %28, %29, %cst_25 {dimension_numbers = #tpu.dot_dimension_numbers<[1], [0], [0], [1], [0, 0, 1, 1], [], []>} : vector<2x32xf32>, vector<32x16xf32>, vector<2x16xf32> -> vector<2x16xf32>
      %c0_26 = arith.constant 0 : index
      %c0_27 = arith.constant 0 : index
      %31 = vector.load %arg7[%c0_26, %c0_27] : memref<1x16xf32, #tpu.memory_space<vmem>>, vector<1x16xf32>
      %32 = vector.broadcast %31 : vector<1x16xf32> to vector<2x16xf32>
      %33 = arith.addf %30, %32 : vector<2x16xf32>
      %34 = arith.negf %33 : vector<2x16xf32>
      %35 = math.exp %34 : vector<2x16xf32>
      %cst_28 = arith.constant 1.000000e+00 : f32
      %36 = vector.broadcast %cst_28 : f32 to vector<2x16xf32>
      %37 = arith.addf %36, %35 : vector<2x16xf32>
      %38 = arith.divf %36, %37 : vector<2x16xf32>
      %39 = arith.mulf %33, %38 : vector<2x16xf32>
      %c0_29 = arith.constant 0 : index
      %c0_30 = arith.constant 0 : index
      %40 = vector.load %arg8[%c0_29, %c0_30] : memref<4x128xf32, #tpu.memory_space<vmem>>, vector<4x128xf32>
      %cst_31 = arith.constant dense<0.000000e+00> : vector<2x128xf32>
      %41 = tpu.matmul %16, %40, %cst_31 {dimension_numbers = #tpu.dot_dimension_numbers<[1], [0], [0], [1], [0, 0, 1, 1], [], []>} : vector<2x4xf32>, vector<4x128xf32>, vector<2x128xf32> -> vector<2x128xf32>
      %c0_32 = arith.constant 0 : index
      %c0_33 = arith.constant 0 : index
      %42 = vector.load %arg9[%c0_32, %c0_33] : memref<16x128xf32, #tpu.memory_space<vmem>>, vector<16x128xf32>
      %cst_34 = arith.constant dense<0.000000e+00> : vector<2x128xf32>
      %43 = tpu.matmul %39, %42, %cst_34 {dimension_numbers = #tpu.dot_dimension_numbers<[1], [0], [0], [1], [0, 0, 1, 1], [], []>} : vector<2x16xf32>, vector<16x128xf32>, vector<2x128xf32> -> vector<2x128xf32>
      %44 = arith.addf %41, %43 : vector<2x128xf32>
      %c0_35 = arith.constant 0 : index
      %c0_36 = arith.constant 0 : index
      %45 = vector.load %arg10[%c0_35, %c0_36] : memref<1x128xf32, #tpu.memory_space<vmem>>, vector<1x128xf32>
      %46 = vector.broadcast %45 : vector<1x128xf32> to vector<2x128xf32>
      %47 = arith.addf %44, %46 : vector<2x128xf32>
      %c0_37 = arith.constant 0 : index
      %c0_38 = arith.constant 0 : index
      %48 = vector.load %arg11[%c0_37, %c0_38] : memref<2x128xf32, #tpu.memory_space<vmem>>, vector<2x128xf32>
      tpu.vector_store %arg11[%c0_37, %c0_38], %47 {strides = array<i32>} : memref<2x128xf32, #tpu.memory_space<vmem>>, vector<2x128xf32>,
    } else {
    }
    return
  }
  func.func @transform_0(%arg0: i32, %arg1: i32) -> (i32, i32, i32) {
    %c0_i32 = arith.constant 0 : i32
    %c0_i32_0 = arith.constant 0 : i32
    return %arg0, %c0_i32, %arg1 : i32, i32, i32
  }
  func.func @transform_1(%arg0: i32, %arg1: i32) -> (i32, i32) {
    %c0_i32 = arith.constant 0 : i32
    %c0_i32_0 = arith.constant 0 : i32
    return %arg0, %c0_i32 : i32, i32
  }
  func.func @transform_2(%arg0: i32, %arg1: i32) -> (i32, i32) {
    %c0_i32 = arith.constant 0 : i32
    %c0_i32_0 = arith.constant 0 : i32
    %c0_i32_1 = arith.constant 0 : i32
    return %c0_i32, %c0_i32_0 : i32, i32
  }
  func.func @transform_3(%arg0: i32, %arg1: i32) -> (i32, i32) {
    %c0_i32 = arith.constant 0 : i32
    %c0_i32_0 = arith.constant 0 : i32
    %c0_i32_1 = arith.constant 0 : i32
    return %c0_i32, %c0_i32_0 : i32, i32
  }
  func.func @transform_4(%arg0: i32, %arg1: i32) -> (i32, i32) {
    %c0_i32 = arith.constant 0 : i32
    %c0_i32_0 = arith.constant 0 : i32
    %c0_i32_1 = arith.constant 0 : i32
    return %c0_i32, %c0_i32_0 : i32, i32
  }
  func.func @transform_5(%arg0: i32, %arg1: i32) -> (i32, i32) {
    %c0_i32 = arith.constant 0 : i32
    %c0_i32_0 = arith.constant 0 : i32
    %c0_i32_1 = arith.constant 0 : i32
    return %c0_i32, %c0_i32_0 : i32, i32
  }
  func.func @transform_6(%arg0: i32, %arg1: i32) -> (i32, i32) {
    %c0_i32 = arith.constant 0 : i32
    %c0_i32_0 = arith.constant 0 : i32
    %c0_i32_1 = arith.constant 0 : i32
    return %c0_i32, %c0_i32_0 : i32, i32
  }
  func.func @transform_7(%arg0: i32, %arg1: i32) -> (i32, i32) {
    %c0_i32 = arith.constant 0 : i32
    %c0_i32_0 = arith.constant 0 : i32
    %c0_i32_1 = arith.constant 0 : i32
    return %c0_i32, %c0_i32_0 : i32, i32
  }
  func.func @transform_8(%arg0: i32, %arg1: i32) -> (i32, i32) {
    %c0_i32 = arith.constant 0 : i32
    %c0_i32_0 = arith.constant 0 : i32
    %c0_i32_1 = arith.constant 0 : i32
    return %c0_i32, %c0_i32_0 : i32, i32
  }
  func.func @transform_9(%arg0: i32, %arg1: i32) -> (i32, i32) {
    %c0_i32 = arith.constant 0 : i32
    %c0_i32_0 = arith.constant 0 : i32
    return %arg0, %c0_i32 : i32, i32
  }
}

</mosaic_0001>

<llo_original>
// kernel: tpu_custom_call.1
$region0: #{tpu_custom_call.1}
  #allocation0 [shape = 'u32[]', space=smem, size = 0x4, offset = 0x4, fixed_abs, tag = 'smem constant byte address 0x4 - core index']
  #allocation1 [shape = 'u32[144,128]{1,0:T(1,128)}', space=vmem, size = 0x12000, scoped, tag = 'internal scratch']
  #allocation2 [shape = 'f32[2,4,128]{2,1,0:T(4,128)}', space=vmem, size = 0x1000, scoped, tag = 'scratch operand']
  %s0 = inlined_call_operand.vmem [shape: f32[2,4,256], index: 0, kind: input, shape index: {}]
  %s1 = inlined_call_operand.vmem [shape: f32[2,8], index: 1, kind: input, shape index: {}]
  %s2 = inlined_call_operand.vmem [shape: f32[8,32], index: 2, kind: input, shape index: {}]
  %s3 = inlined_call_operand.vmem [shape: f32[1,32], index: 3, kind: input, shape index: {}]
  %s4 = inlined_call_operand.vmem [shape: f32[32,16], index: 4, kind: input, shape index: {}]
  %s5 = inlined_call_operand.vmem [shape: f32[1,16], index: 5, kind: input, shape index: {}]
  %s6 = inlined_call_operand.vmem [shape: f32[4,128], index: 6, kind: input, shape index: {}]
  %s7 = inlined_call_operand.vmem [shape: f32[16,128], index: 7, kind: input, shape index: {}]
  %s8 = inlined_call_operand.vmem [shape: f32[1,128], index: 8, kind: input, shape index: {}]
  %s9 = inlined_call_operand.hbm [shape: f32[2,128], index: 9, kind: output, shape index: {}]
  %s10 = sld [smem:[#allocation0]]
  $region54: #{tpu_custom_call.1} parent=0
    _
  %s12 = ssub.s32 1, %s10
  %s13 = scalar_select 0, %s12, %s10
  $region1: #{tpu_custom_call.1} parent=0
    #allocation3 [shape = 'u8[1024]{0}', space=vmem, size = 0x400, scoped, tag = 'output window, operand 0, single buffered']
    #allocation4 [shape = 's32[1]{0}', space=sflag, size = 0x4, scoped, tag = 'scoped memory for tpu_custom_call.1']
    %14 = vsyncpa [#allocation4], 0
    // Predicated region
    $region2: #{tpu_custom_call.1} parent=1 // pred_check
      _
    $region3: #{tpu_custom_call.1} parent=1 // pred_check_branch
      %16 = sbr.rel (0) target = $region5
    $region4: #{tpu_custom_call.1} parent=1 // pred_region
      _
    $region5: #{tpu_custom_call.1} parent=1 // pred_fallthru
      _
    // Predicated region
    $region6: #{tpu_custom_call.1} parent=1 // pred_check
      _
    $region7: #{tpu_custom_call.1} parent=1 // pred_check_branch
      %18 = sbr.rel (0) target = $region9
    $region8: #{tpu_custom_call.1} parent=1 // pred_region
      _
    $region9: #{tpu_custom_call.1} parent=1 // pred_fallthru
      _
    // Predicated region
    $region10: #{tpu_custom_call.1} parent=1 // pred_check
      _
    $region11: #{tpu_custom_call.1} parent=1 // pred_check_branch
      %20 = sbr.rel (0) target = $region13
    $region12: #{tpu_custom_call.1} parent=1 // pred_region
      _
    $region13: #{tpu_custom_call.1} parent=1 // pred_fallthru
      _
    // Predicated region
    $region14: #{tpu_custom_call.1} parent=1 // pred_check
      _
    $region15: #{tpu_custom_call.1} parent=1 // pred_check_branch
      %22 = sbr.rel (0) target = $region17
    $region16: #{tpu_custom_call.1} parent=1 // pred_region
      _
    $region17: #{tpu_custom_call.1} parent=1 // pred_fallthru
      _
    // Predicated region
    $region18: #{tpu_custom_call.1} parent=1 // pred_check
      _
    $region19: #{tpu_custom_call.1} parent=1 // pred_check_branch
      %24 = sbr.rel (0) target = $region21
    $region20: #{tpu_custom_call.1} parent=1 // pred_region
      _
    $region21: #{tpu_custom_call.1} parent=1 // pred_fallthru
      _
    // Predicated region
    $region22: #{tpu_custom_call.1} parent=1 // pred_check
      _
    $region23: #{tpu_custom_call.1} parent=1 // pred_check_branch
      %26 = sbr.rel (0) target = $region25
    $region24: #{tpu_custom_call.1} parent=1 // pred_region
      _
    $region25: #{tpu_custom_call.1} parent=1 // pred_fallthru
      _
    // Predicated region
    $region26: #{tpu_custom_call.1} parent=1 // pred_check
      _
    $region27: #{tpu_custom_call.1} parent=1 // pred_check_branch
      %28 = sbr.rel (0) target = $region29
    $region28: #{tpu_custom_call.1} parent=1 // pred_region
      _
    $region29: #{tpu_custom_call.1} parent=1 // pred_fallthru
      _
    // Predicated region
    $region30: #{tpu_custom_call.1} parent=1 // pred_check
      _
    $region31: #{tpu_custom_call.1} parent=1 // pred_check_branch
      %30 = sbr.rel (0) target = $region33
    $region32: #{tpu_custom_call.1} parent=1 // pred_region
      _
    $region33: #{tpu_custom_call.1} parent=1 // pred_fallthru
      _
    // Predicated region
    $region34: #{tpu_custom_call.1} parent=1 // pred_check
      _
    $region35: #{tpu_custom_call.1} parent=1 // pred_check_branch
      %32 = sbr.rel (0) target = $region37
    $region36: #{tpu_custom_call.1} parent=1 // pred_region
      _
    $region37: #{tpu_custom_call.1} parent=1 // pred_fallthru
      _
    %p33 = scmp.eq.s32.totalorder 0, 0
    // Predicated region
    $region38: #{tpu_custom_call.1} parent=1 // pred_check
      %p34 = pneg %p33
    $region39: #{tpu_custom_call.1} parent=1 // pred_check_branch
      %36 = sbr.rel (%p34) target = $region41
    $region40: #{tpu_custom_call.1} parent=1 // pred_region
      %37 = vst [vmem:[#allocation2] sm:$0xf] 0.0
      %38 = vst [vmem:[#allocation2 + $0x4] sm:$0xf] 0.0
    $region41: #{tpu_custom_call.1} parent=1 // pred_fallthru
      _
    %v39 = vld [vmem:[%s0] sm:$0xff]
    %v40 = vld [vmem:[%s0 + $0x8] sm:$0xff]
    %v43 = vrot.slane %v39, 4
    %v44 = vrot.slane %v40, 4
    %v47 = vadd.f32 %v39, %v43
    %v48 = vadd.f32 %v40, %v44
    %v49 = vld [vmem:[#allocation2] sm:$0xf]
    %v50 = vld [vmem:[#allocation2 + $0x4] sm:$0xf]
    %v51 = vadd.f32 %v49, %v47
    %v52 = vadd.f32 %v50, %v48
    %53 = vst [vmem:[#allocation2] sm:$0xf] %v51
    %54 = vst [vmem:[#allocation2 + $0x4] sm:$0xf] %v52
    // Predicated region
    $region42: #{tpu_custom_call.1} parent=1 // pred_check
      %p55 = pneg %p33
    $region43: #{tpu_custom_call.1} parent=1 // pred_check_branch
      %57 = sbr.rel (%p55) target = $region45
    $region44: #{tpu_custom_call.1} parent=1 // pred_region
      %v58 = vld [vmem:[#allocation2] sm:$0xf]
      %v59 = vld [vmem:[#allocation2 + $0x4] sm:$0xf]
      %vm60 = vcmask 1043456
      %v61 = vsel %vm60, %v58, 0.0
      %62 = vadd.xlane.f32.xlu0 %v61
      %v63 = vpop.xlane.xlu0 %62
      %v64 = vsel %vm60, %v59, 0.0
      %65 = vadd.xlane.f32.xlu0 %v64
      %v66 = vpop.xlane.xlu0 %65
      %v67 = vmul.f32 %v63, 0.00390625
      %v68 = vmul.f32 %v66, 0.00390625
      %v69 = vld [vmem:[%s1] sm:$0x3]
      %v70 = vld [vmem:[%s2] sm:$0xff]
      %v71 = vld [vmem:[%s3] sm:$0x1]
      %v73 = vlaneseq
      %v74 = vshrl.u32 %v73, 7
      %v75 = vsub.s32 0, %v74
      %v76 = vrot.slane %v71, %v75
      %vm78 = vcmask 64512
      %v80 = vsel %vm78, %v69, 0
      %82 = vmatprep.subr.mxu0 0.0
      %83 = vmatpush1.msra.mxu0 %v70
      %84 = vmatprep.subr.mxu0 0.0
      %85 = vmatpush1.msra.mxu0 0.0
      %86 = vmatprep.subr.mxu0 0.0
      %87 = vmatpush1.msra.mxu0 0.0
      %88 = vmatprep.subr.mxu0 0.0
      %89 = vmatpush1.msra.mxu0 0.0
      %90 = vmatprep.subr.mxu0 0.0
      %91 = vmatpush1.msra.mxu0 0.0
      %92 = vmatprep.subr.mxu0 0.0
      %93 = vmatpush1.msra.mxu0 0.0
      %94 = vmatprep.subr.mxu0 0.0
      %95 = vmatpush1.msra.mxu0 0.0
      %96 = vmatprep.subr.mxu0 0.0
      %97 = vmatpush1.msra.mxu0 0.0
      %98 = vmatprep.subr.mxu0 0.0
      %99 = vmatpush1.msra.mxu0 0.0
      %100 = vmatprep.subr.mxu0 0.0
      %101 = vmatpush1.msra.mxu0 0.0
      %102 = vmatprep.subr.mxu0 0.0
      %103 = vmatpush1.msra.mxu0 0.0
      %104 = vmatprep.subr.mxu0 0.0
      %105 = vmatpush1.msra.mxu0 0.0
      %106 = vmatprep.subr.mxu0 0.0
      %107 = vmatpush1.msra.mxu0 0.0
      %108 = vmatprep.subr.mxu0 0.0
      %109 = vmatpush1.msra.mxu0 0.0
      %110 = vmatprep.subr.mxu0 0.0
      %111 = vmatpush1.msra.mxu0 0.0
      %112 = vmatprep.subr.mxu0 0.0
      %113 = vmatpush1.msra.mxu0 0.0
      %114 = vmatprep.subr.mxu0 0.0
      %115 = vmatpush1.msra.mxu0 0.0
      %116 = vmatprep.subr.mxu0 0.0
      %117 = vmatpush1.msra.mxu0 0.0
      %118 = vmatprep.subr.mxu0 0.0
      %119 = vmatpush1.msra.mxu0 0.0
      %120 = vmatprep.subr.mxu0 0.0
      %121 = vmatpush1.msra.mxu0 0.0
      %122 = vmatprep.subr.mxu0 0.0
      %123 = vmatpush1.msra.mxu0 0.0
      %124 = vmatprep.subr.mxu0 0.0
      %125 = vmatpush1.msra.mxu0 0.0
      %126 = vmatprep.subr.mxu0 0.0
      %127 = vmatpush1.msra.mxu0 0.0
      %128 = vmatprep.subr.mxu0 0.0
      %129 = vmatpush1.msra.mxu0 0.0
      %130 = vmatprep.subr.mxu0 0.0
      %131 = vmatpush1.msra.mxu0 0.0
      %132 = vmatprep.subr.mxu0 0.0
      %133 = vmatpush1.msra.mxu0 0.0
      %134 = vmatprep.subr.mxu0 0.0
      %135 = vmatpush1.msra.mxu0 0.0
      %136 = vmatprep.subr.mxu0 0.0
      %137 = vmatpush1.msra.mxu0 0.0
      %138 = vmatprep.subr.mxu0 0.0
      %139 = vmatpush1.msra.mxu0 0.0
      %140 = vmatprep.subr.mxu0 0.0
      %141 = vmatpush1.msra.mxu0 0.0
      %142 = vmatprep.subr.mxu0 0.0
      %143 = vmatpush1.msra.mxu0 0.0
      %144 = vmatprep.subr.mxu0 0.0
      %145 = vmatpush1.msra.mxu0 0.0
      %146 = vmatprep.mubr.f32.mxu0 0.0
      %147 = vmatmul.mubr.f32.gmra.mrb[0].mxu0 %v80
      %v148 = vpop.f32.mrb[0].mxu0
      %v149 = vadd.f32 %v76, %v148
      %v150 = vpop.f32.mrb[0].mxu0
      %151 = vdwg.mxu0
      %v152 = vxor.u32 %v149, 2147483648
      %v153 = vmul.f32 %v152, 1.442695
      %v154 = vpow.pop %v153
      %v155 = vadd.f32 %v154, 1.0
      %v156 = vrcp.pop %v155
      %v157 = vmul.f32 1.0, %v156
      %v158 = vmul.f32 %v149, %v157
      %v159 = vld [vmem:[%s4] sm:$0xff]
      %v160 = vld [vmem:[%s4 + $0x8] sm:$0xff]
      %v161 = vld [vmem:[%s4 + $0x10] sm:$0xff]
      %v162 = vld [vmem:[%s4 + $0x18] sm:$0xff]
      %v163 = vld [vmem:[%s5] sm:$0x1]
      %v165 = vlaneseq
      %v166 = vshrl.u32 %v165, 7
      %v167 = vsub.s32 0, %v166
      %v168 = vrot.slane %v163, %v167
      %vm170 = vcmask 261120
      %v172 = vsel %vm170, %v158, 0
      %174 = vmatprep.subr.mxu0 0.0
      %175 = vmatpush1.msra.mxu0 %v159
      %176 = vmatprep.subr.mxu0 0.0
      %177 = vmatpush1.msra.mxu0 %v160
      %178 = vmatprep.subr.mxu0 0.0
      %179 = vmatpush1.msra.mxu0 %v161
      %180 = vmatprep.subr.mxu0 0.0
      %181 = vmatpush1.msra.mxu0 %v162
      %182 = vmatprep.subr.mxu0 0.0
      %183 = vmatpush1.msra.mxu0 0.0
      %184 = vmatprep.subr.mxu0 0.0
      %185 = vmatpush1.msra.mxu0 0.0
      %186 = vmatprep.subr.mxu0 0.0
      %187 = vmatpush1.msra.mxu0 0.0
      %188 = vmatprep.subr.mxu0 0.0
      %189 = vmatpush1.msra.mxu0 0.0
      %190 = vmatprep.subr.mxu0 0.0
      %191 = vmatpush1.msra.mxu0 0.0
      %192 = vmatprep.subr.mxu0 0.0
      %193 = vmatpush1.msra.mxu0 0.0
      %194 = vmatprep.subr.mxu0 0.0
      %195 = vmatpush1.msra.mxu0 0.0
      %196 = vmatprep.subr.mxu0 0.0
      %197 = vmatpush1.msra.mxu0 0.0
      %198 = vmatprep.subr.mxu0 0.0
      %199 = vmatpush1.msra.mxu0 0.0
      %200 = vmatprep.subr.mxu0 0.0
      %201 = vmatpush1.msra.mxu0 0.0
      %202 = vmatprep.subr.mxu0 0.0
      %203 = vmatpush1.msra.mxu0 0.0
      %204 = vmatprep.subr.mxu0 0.0
      %205 = vmatpush1.msra.mxu0 0.0
      %206 = vmatprep.subr.mxu0 0.0
      %207 = vmatpush1.msra.mxu0 0.0
      %208 = vmatprep.subr.mxu0 0.0
      %209 = vmatpush1.msra.mxu0 0.0
      %210 = vmatprep.subr.mxu0 0.0
      %211 = vmatpush1.msra.mxu0 0.0
      %212 = vmatprep.subr.mxu0 0.0
      %213 = vmatpush1.msra.mxu0 0.0
      %214 = vmatprep.subr.mxu0 0.0
      %215 = vmatpush1.msra.mxu0 0.0
      %216 = vmatprep.subr.mxu0 0.0
      %217 = vmatpush1.msra.mxu0 0.0
      %218 = vmatprep.subr.mxu0 0.0
      %219 = vmatpush1.msra.mxu0 0.0
      %220 = vmatprep.subr.mxu0 0.0
      %221 = vmatpush1.msra.mxu0 0.0
      %222 = vmatprep.subr.mxu0 0.0
      %223 = vmatpush1.msra.mxu0 0.0
      %224 = vmatprep.subr.mxu0 0.0
      %225 = vmatpush1.msra.mxu0 0.0
      %226 = vmatprep.subr.mxu0 0.0
      %227 = vmatpush1.msra.mxu0 0.0
      %228 = vmatprep.subr.mxu0 0.0
      %229 = vmatpush1.msra.mxu0 0.0
      %230 = vmatprep.subr.mxu0 0.0
      %231 = vmatpush1.msra.mxu0 0.0
      %232 = vmatprep.subr.mxu0 0.0
      %233 = vmatpush1.msra.mxu0 0.0
      %234 = vmatprep.subr.mxu0 0.0
      %235 = vmatpush1.msra.mxu0 0.0
      %236 = vmatprep.subr.mxu0 0.0
      %237 = vmatpush1.msra.mxu0 0.0
      %238 = vmatprep.mubr.f32.mxu0 0.0
      %239 = vmatmul.mubr.f32.gmra.mrb[0].mxu0 %v172
      %v240 = vpop.f32.mrb[0].mxu0
      %v241 = vadd.f32 %v168, %v240
      %v242 = vpop.f32.mrb[0].mxu0
      %243 = vdwg.mxu0
      %v244 = vxor.u32 %v241, 2147483648
      %v245 = vmul.f32 %v244, 1.442695
      %v246 = vpow.pop %v245
      %v247 = vadd.f32 %v246, 1.0
      %v248 = vrcp.pop %v247
      %v249 = vmul.f32 1.0, %v248
      %v250 = vmul.f32 %v241, %v249
      %v251 = vld [vmem:[%s6] sm:$0xf]
      %v252 = vld [vmem:[%s7] sm:$0xff]
      %v253 = vld [vmem:[%s7 + $0x8] sm:$0xff]
      %vm254 = vcmask 130048
      %v256 = vsel %vm254, %v250, 0
      %258 = vmatprep.subr.mxu0 0.0
      %259 = vmatpush1.msra.mxu0 %v252
      %260 = vmatprep.subr.mxu0 0.0
      %261 = vmatpush1.msra.mxu0 %v253
      %262 = vmatprep.subr.mxu0 0.0
      %263 = vmatpush1.msra.mxu0 0.0
      %264 = vmatprep.subr.mxu0 0.0
      %265 = vmatpush1.msra.mxu0 0.0
      %266 = vmatprep.subr.mxu0 0.0
      %267 = vmatpush1.msra.mxu0 0.0
      %268 = vmatprep.subr.mxu0 0.0
      %269 = vmatpush1.msra.mxu0 0.0
      %270 = vmatprep.subr.mxu0 0.0
      %271 = vmatpush1.msra.mxu0 0.0
      %272 = vmatprep.subr.mxu0 0.0
      %273 = vmatpush1.msra.mxu0 0.0
      %274 = vmatprep.subr.mxu0 0.0
      %275 = vmatpush1.msra.mxu0 0.0
      %276 = vmatprep.subr.mxu0 0.0
      %277 = vmatpush1.msra.mxu0 0.0
      %278 = vmatprep.subr.mxu0 0.0
      %279 = vmatpush1.msra.mxu0 0.0
      %280 = vmatprep.subr.mxu0 0.0
      %281 = vmatpush1.msra.mxu0 0.0
      %282 = vmatprep.subr.mxu0 0.0
      %283 = vmatpush1.msra.mxu0 0.0
      %284 = vmatprep.subr.mxu0 0.0
      %285 = vmatpush1.msra.mxu0 0.0
      %286 = vmatprep.subr.mxu0 0.0
      %287 = vmatpush1.msra.mxu0 0.0
      %288 = vmatprep.subr.mxu0 0.0
      %289 = vmatpush1.msra.mxu0 0.0
      %290 = vmatprep.subr.mxu0 0.0
      %291 = vmatpush1.msra.mxu0 0.0
      %292 = vmatprep.subr.mxu0 0.0
      %293 = vmatpush1.msra.mxu0 0.0
      %294 = vmatprep.subr.mxu0 0.0
      %295 = vmatpush1.msra.mxu0 0.0
      %296 = vmatprep.subr.mxu0 0.0
      %297 = vmatpush1.msra.mxu0 0.0
      %298 = vmatprep.subr.mxu0 0.0
      %299 = vmatpush1.msra.mxu0 0.0
      %300 = vmatprep.subr.mxu0 0.0
      %301 = vmatpush1.msra.mxu0 0.0
      %302 = vmatprep.subr.mxu0 0.0
      %303 = vmatpush1.msra.mxu0 0.0
      %304 = vmatprep.subr.mxu0 0.0
      %305 = vmatpush1.msra.mxu0 0.0
      %306 = vmatprep.subr.mxu0 0.0
      %307 = vmatpush1.msra.mxu0 0.0
      %308 = vmatprep.subr.mxu0 0.0
      %309 = vmatpush1.msra.mxu0 0.0
      %310 = vmatprep.subr.mxu0 0.0
      %311 = vmatpush1.msra.mxu0 0.0
      %312 = vmatprep.subr.mxu0 0.0
      %313 = vmatpush1.msra.mxu0 0.0
      %314 = vmatprep.subr.mxu0 0.0
      %315 = vmatpush1.msra.mxu0 0.0
      %316 = vmatprep.subr.mxu0 0.0
      %317 = vmatpush1.msra.mxu0 0.0
      %318 = vmatprep.subr.mxu0 0.0
      %319 = vmatpush1.msra.mxu0 0.0
      %320 = vmatprep.subr.mxu0 0.0
      %321 = vmatpush1.msra.mxu0 0.0
      %322 = vmatprep.mubr.f32.mxu0 0.0
      %323 = vmatmul.mubr.f32.gmra.mrb[0].mxu0 %v256
      %v324 = vpop.f32.mrb[0].mxu0
      %v325 = vadd.f32 0.0, %v324
      %v326 = vpop.f32.mrb[0].mxu0
      %327 = vdwg.mxu0
      %v330 = vlaneseq
      %v331 = vand.u32 %v330, 127
      %v332 = vlaneseq
      %v333 = vshrl.u32 %v332, 7
      %v334 = vsub.s32 %v331, %v333
      %v335 = vrot.slane %v67, %v334
      %v336 = vlaneseq
      %v337 = vshrl.u32 %v336, 7
      %v338 = vsub.s32 %v331, %v337
      %v339 = vrot.slane %v68, %v338
      %vm340 = vcmask 1041409
      %v341 = vsel %vm340, %v339, %v335
      %vm342 = vcmask 31744
      %v343 = vsel %vm342, %v341, 0
      %v346 = vsel %vm60, %v251, 0
      %348 = vmatprep.subr.mxu0 0.0
      %349 = vmatpush1.msra.mxu0 %v346
      %350 = vmatprep.subr.mxu0 0.0
      %351 = vmatpush1.msra.mxu0 0.0
      %352 = vmatprep.subr.mxu0 0.0
      %353 = vmatpush1.msra.mxu0 0.0
      %354 = vmatprep.subr.mxu0 0.0
      %355 = vmatpush1.msra.mxu0 0.0
      %356 = vmatprep.subr.mxu0 0.0
      %357 = vmatpush1.msra.mxu0 0.0
      %358 = vmatprep.subr.mxu0 0.0
      %359 = vmatpush1.msra.mxu0 0.0
      %360 = vmatprep.subr.mxu0 0.0
      %361 = vmatpush1.msra.mxu0 0.0
      %362 = vmatprep.subr.mxu0 0.0
      %363 = vmatpush1.msra.mxu0 0.0
      %364 = vmatprep.subr.mxu0 0.0
      %365 = vmatpush1.msra.mxu0 0.0
      %366 = vmatprep.subr.mxu0 0.0
      %367 = vmatpush1.msra.mxu0 0.0
      %368 = vmatprep.subr.mxu0 0.0
      %369 = vmatpush1.msra.mxu0 0.0
      %370 = vmatprep.subr.mxu0 0.0
      %371 = vmatpush1.msra.mxu0 0.0
      %372 = vmatprep.subr.mxu0 0.0
      %373 = vmatpush1.msra.mxu0 0.0
      %374 = vmatprep.subr.mxu0 0.0
      %375 = vmatpush1.msra.mxu0 0.0
      %376 = vmatprep.subr.mxu0 0.0
      %377 = vmatpush1.msra.mxu0 0.0
      %378 = vmatprep.subr.mxu0 0.0
      %379 = vmatpush1.msra.mxu0 0.0
      %380 = vmatprep.subr.mxu0 0.0
      %381 = vmatpush1.msra.mxu0 0.0
      %382 = vmatprep.subr.mxu0 0.0
      %383 = vmatpush1.msra.mxu0 0.0
      %384 = vmatprep.subr.mxu0 0.0
      %385 = vmatpush1.msra.mxu0 0.0
      %386 = vmatprep.subr.mxu0 0.0
      %387 = vmatpush1.msra.mxu0 0.0
      %388 = vmatprep.subr.mxu0 0.0
      %389 = vmatpush1.msra.mxu0 0.0
      %390 = vmatprep.subr.mxu0 0.0
      %391 = vmatpush1.msra.mxu0 0.0
      %392 = vmatprep.subr.mxu0 0.0
      %393 = vmatpush1.msra.mxu0 0.0
      %394 = vmatprep.subr.mxu0 0.0
      %395 = vmatpush1.msra.mxu0 0.0
      %396 = vmatprep.subr.mxu0 0.0
      %397 = vmatpush1.msra.mxu0 0.0
      %398 = vmatprep.subr.mxu0 0.0
      %399 = vmatpush1.msra.mxu0 0.0
      %400 = vmatprep.subr.mxu0 0.0
      %401 = vmatpush1.msra.mxu0 0.0
      %402 = vmatprep.subr.mxu0 0.0
      %403 = vmatpush1.msra.mxu0 0.0
      %404 = vmatprep.subr.mxu0 0.0
      %405 = vmatpush1.msra.mxu0 0.0
      %406 = vmatprep.subr.mxu0 0.0
      %407 = vmatpush1.msra.mxu0 0.0
      %408 = vmatprep.subr.mxu0 0.0
      %409 = vmatpush1.msra.mxu0 0.0
      %410 = vmatprep.subr.mxu0 0.0
      %411 = vmatpush1.msra.mxu0 0.0
      %412 = vmatprep.mubr.f32.mxu0 0.0
      %413 = vmatmul.mubr.f32.gmra.mrb[0].mxu0 %v343
      %v414 = vpop.f32.mrb[0].mxu0
      %v415 = vadd.f32 %v325, %v414
      %v416 = vpop.f32.mrb[0].mxu0
      %417 = vdwg.mxu0
      %v418 = vld [vmem:[%s8] sm:$0x1]
      %v420 = vlaneseq
      %v421 = vshrl.u32 %v420, 7
      %v422 = vsub.s32 0, %v421
      %v423 = vrot.slane %v418, %v422
      %v425 = vadd.f32 %v415, %v423
      %426 = vst [vmem:[#allocation3] sm:$0x3] %v425
    $region45: #{tpu_custom_call.1} parent=1 // pred_fallthru
      _
    // Predicated region
    $region46: #{tpu_custom_call.1} parent=1 // pred_check
      _
    $region47: #{tpu_custom_call.1} parent=1 // pred_check_branch
      %428 = sbr.rel (0) target = $region49
    $region48: #{tpu_custom_call.1} parent=1 // pred_region
      %s430 = ssub.s32 32, 32
      %431 = vsyncadd [#allocation4], %s430
      %s433 = sshll.u32 [#allocation3], 4
      %s434 = int_to_ptr.vmem [resolvable:$true] %s433
      %436 = dma.vmem_to_hbm [thread:$0]  %s434, 32, %s9, [#allocation4]
    $region49: #{tpu_custom_call.1} parent=1 // pred_fallthru
      _
    // Predicated region
    $region50: #{tpu_custom_call.1} parent=1 // pred_check
      _
    $region51: #{tpu_custom_call.1} parent=1 // pred_check_branch
      %438 = sbr.rel (0) target = $region53
    $region52: #{tpu_custom_call.1} parent=1 // pred_region
      %439 = dma.done [#allocation4], 32
    $region53: #{tpu_custom_call.1} parent=1 // pred_fallthru
      _
    %440 = vsyncpa [#allocation4], 1

</llo_original>
